<compile_context>
chip_gen: v6e
topology: v6e:2x2x1
jax: 0.10.0
libtpu: 0.0.40
codegen_flags: <defaults>
</compile_context>

<pallas_src>
import jax
import jax.numpy as jnp
from jax import lax
from jax.experimental import pallas as pl
from jax.experimental.pallas import tpu as pltpu

# Module configuration (mirrors ImprovedCountLoss(pos_weight=2.0,
# pixel_weight_strategy='density', channel_weights=torch.tensor([1.5]))).
# NOTE: PyTorch's 'density' strategy uses F.conv2d with a (1, 1, 5, 5) kernel,
# which only type-checks for C == 1, so C == 1 matches the reference semantics.
POS_WEIGHT = 2.0
KERNEL_SIZE = 5
PAD = KERNEL_SIZE // 2
# pixel_weights = 1 + 2 * (box_sum / 25)  ->  1 + DENSITY_SCALE * box_sum
DENSITY_SCALE = 2.0 / float(KERNEL_SIZE * KERNEL_SIZE)


def _shifted(a, d, axis):
    """out[..., i, ...] = a[..., i + d, ...] along `axis`, zero outside [0, size).

    Implemented as an XLU rotate (pltpu.roll) plus a VPU select, so the whole
    box filter stays in vregs (no padded VMEM scratch, no unaligned slices).
    """
    size = a.shape[axis]
    rolled = pltpu.roll(a, shift=(-d) % size, axis=axis)
    idx = lax.broadcasted_iota(jnp.int32, a.shape, axis)
    return jnp.where((idx + d >= 0) & (idx + d < size), rolled, 0.0)


def _improved_count_loss_kernel(x_ref, y_ref, out_ref):
    """One grid step = one batch element.

    For each channel writes the lane partial
        out[0, c, w] = sum_h BCEWithLogits(x, y; pos_weight)[h, w] * (1 + 2*density[h, w])
    The cross-lane reduction, channel weights and global mean scale are applied
    to the tiny (B, C, W) output in the wrapper.
    """
    _, C, H, W = x_ref.shape

    for c in range(C):  # static; the 'density' strategy implies C == 1
        x = x_ref[0, c].astype(jnp.float32)  # (H, W); f32 math (v5e has no bf16 VPU/EUP)
        y = y_ref[0, c].astype(jnp.float32)  # (H, W)

        # ---- BCEWithLogitsLoss(reduction='none', pos_weight=p), numerically stable:
        #   l = (1 - y) * x + (1 + (p - 1) * y) * softplus(-x)
        softplus_neg_x = jnp.maximum(-x, 0.0) + jnp.log1p(jnp.exp(-jnp.abs(x)))
        bce = (1.0 - y) * x + (1.0 + (POS_WEIGHT - 1.0) * y) * softplus_neg_x

        # ---- 'density': separable zero-padded 5x5 box sum, entirely in registers.
        # W direction (lane axis) then H direction (sublane axis): 8 rolls + adds.
        rowsum = y
        for d in range(1, PAD + 1):
            rowsum = rowsum + _shifted(y, d, 1) + _shifted(y, -d, 1)
        boxsum = rowsum
        for d in range(1, PAD + 1):
            boxsum = boxsum + _shifted(rowsum, d, 0) + _shifted(rowsum, -d, 0)

        # pixel_weights = 1 + 2 * density, with the 1/25 folded into DENSITY_SCALE.
        weighted = bce * (1.0 + DENSITY_SCALE * boxsum)

        # Sublane-only reduction -> lane-dense (W,) partial (unmasked vst for
        # W % 128 == 0); no cross-lane reduce / scalar broadcast in the kernel.
        out_ref[0, c, :] = jnp.sum(weighted, axis=0)


def improved_count_loss(logits, target, channel_weights):
    """JAX wrapper reproducing ImprovedCountLoss.forward(logits, target)."""
    B, C, H, W = logits.shape

    # TODO(synk): for large maps (e.g. 2048x2048) tile H on a second "parallel"
    # grid axis with a 2-row halo on the target (element-offset blocks or a
    # manual-DMA pipeline) so the per-step footprint stays within v7x's 64 MiB /
    # v5e's 16 MiB scoped VMEM and the pipeline gets enough steps; at the small
    # shapes here a full (1, C, H, W) block per batch element is already tiny.
    partial = pl.pallas_call(
        _improved_count_loss_kernel,
        out_shape=jax.ShapeDtypeStruct((B, C, W), jnp.float32),
        grid=(B,),
        in_specs=[
            pl.BlockSpec((1, C, H, W), lambda b: (b, 0, 0, 0)),
            pl.BlockSpec((1, C, H, W), lambda b: (b, 0, 0, 0)),
        ],
        out_specs=pl.BlockSpec((1, C, W), lambda b: (b, 0, 0)),
        compiler_params=pltpu.CompilerParams(
            dimension_semantics=("parallel",),        # batch axis -> both TCs on v7x
            vmem_limit_bytes=32 * 1024 * 1024,
        ),
    )(logits, target)

    # Finish the lane reduction and fold channel weights + the 1/(B*C*H*W) mean
    # scale into the tiny (B, C) partial sums instead of per-element multiplies.
    per_bc = jnp.sum(partial, axis=-1)                       # (B, C)
    cw = channel_weights.astype(jnp.float32).reshape(1, C)
    loss = jnp.sum(per_bc * cw) * (1.0 / float(B * C * H * W))

    # PyTorch returns torch.zeros(1) on NaN/Inf; the normal path is a 0-dim
    # tensor, so we return a scalar 0.0 here.
    loss = jnp.where(jnp.isnan(loss) | jnp.isinf(loss), jnp.float32(0.0), loss)
    return loss


def _reference_loss(logits, target, channel_weights):
    """Pure-JAX reference (mirrors the PyTorch math) for a correctness check."""
    x = logits.astype(jnp.float32)
    y = target.astype(jnp.float32)
    B, C, H, W = x.shape
    sp = jnp.maximum(-x, 0.0) + jnp.log1p(jnp.exp(-jnp.abs(x)))
    bce = (1.0 - y) * x + (1.0 + (POS_WEIGHT - 1.0) * y) * sp
    ypad = jnp.pad(y, ((0, 0), (0, 0), (PAD, PAD), (PAD, PAD)))
    density = jnp.zeros_like(y)
    for dy in range(KERNEL_SIZE):
        for dx in range(KERNEL_SIZE):
            density = density + ypad[:, :, dy:dy + H, dx:dx + W]
    density = density / float(KERNEL_SIZE * KERNEL_SIZE)
    pw = 1.0 + 2.0 * density
    cw = channel_weights.reshape(1, C, 1, 1).astype(jnp.float32)
    return jnp.mean(bce * pw * cw)


if __name__ == "__main__":
    key = jax.random.PRNGKey(0)
    k1, k2 = jax.random.split(key)

    # Small, lane-dense test shape: W = 128 so every vector op uses all lanes.
    B, C, H, W = 2, 1, 16, 128
    logits = jax.random.normal(k1, (B, C, H, W), dtype=jnp.float32) * 2.0
    target = jax.random.uniform(k2, (B, C, H, W), dtype=jnp.float32)  # prob map in [0, 1]
    channel_weights = jnp.array([1.5], dtype=jnp.float32)             # shape [C]

    loss = jax.block_until_ready(improved_count_loss(logits, target, channel_weights))
    ref = jax.block_until_ready(_reference_loss(logits, target, channel_weights))
    assert jnp.allclose(loss, ref, atol=1e-5, rtol=1e-5), (loss, ref)

    print("KERNEL_OK")
</pallas_src>

<mosaic_0001>
module attributes {stable_mosaic.version = 11 : i64} {
  func.func @_improved_count_loss_kernel(%arg0: i32, %arg1: memref<1x1x16x128xf32, #tpu.memory_space<vmem>>, %arg2: memref<1x1x16x128xf32, #tpu.memory_space<vmem>>, %arg3: memref<1x1x128xf32, #tpu.memory_space<vmem>>) attributes {dimension_semantics = [#tpu.dimension_semantics<parallel>], iteration_bounds = array<i64: 2>, scalar_prefetch = 0 : i64, scratch_operands = 0 : i64, tpu.core_type = #tpu.core_type<tc>, window_params = [{transform_indices = @transform_0, window_bounds = array<i64: 1, 1, 16, 128>}, {transform_indices = @transform_1, window_bounds = array<i64: 1, 1, 16, 128>}, {transform_indices = @transform_2, window_bounds = array<i64: 1, 1, 128>}]} {
    %c0 = arith.constant 0 : index
    %c0_0 = arith.constant 0 : index
    %c0_1 = arith.constant 0 : index
    %c0_2 = arith.constant 0 : index
    %0 = vector.load %arg1[%c0, %c0_0, %c0_1, %c0_2] : memref<1x1x16x128xf32, #tpu.memory_space<vmem>>, vector<1x1x16x128xf32>
    %1 = vector.shape_cast %0 : vector<1x1x16x128xf32> to vector<16x128xf32>
    %c0_3 = arith.constant 0 : index
    %c0_4 = arith.constant 0 : index
    %c0_5 = arith.constant 0 : index
    %c0_6 = arith.constant 0 : index
    %2 = vector.load %arg2[%c0_3, %c0_4, %c0_5, %c0_6] : memref<1x1x16x128xf32, #tpu.memory_space<vmem>>, vector<1x1x16x128xf32>
    %3 = vector.shape_cast %2 : vector<1x1x16x128xf32> to vector<16x128xf32>
    %cst = arith.constant 0.000000e+00 : f32
    %4 = vector.broadcast %cst : f32 to vector<16x128xf32>
    %5 = arith.subf %4, %1 : vector<16x128xf32>
    %cst_7 = arith.constant 0.000000e+00 : f32
    %6 = vector.broadcast %cst_7 : f32 to vector<16x128xf32>
    %7 = arith.maximumf %5, %6 : vector<16x128xf32>
    %8 = math.absf %1 : vector<16x128xf32>
    %cst_8 = arith.constant 0.000000e+00 : f32
    %9 = vector.broadcast %cst_8 : f32 to vector<16x128xf32>
    %10 = arith.subf %9, %8 : vector<16x128xf32>
    %11 = math.exp %10 : vector<16x128xf32>
    %12 = math.log1p %11 : vector<16x128xf32>
    %13 = arith.addf %7, %12 : vector<16x128xf32>
    %cst_9 = arith.constant 1.000000e+00 : f32
    %14 = vector.broadcast %cst_9 : f32 to vector<16x128xf32>
    %15 = arith.subf %14, %3 : vector<16x128xf32>
    %16 = arith.mulf %15, %1 : vector<16x128xf32>
    %cst_10 = arith.constant 1.000000e+00 : f32
    %17 = vector.broadcast %cst_10 : f32 to vector<16x128xf32>
    %18 = arith.mulf %17, %3 : vector<16x128xf32>
    %cst_11 = arith.constant 1.000000e+00 : f32
    %19 = vector.broadcast %cst_11 : f32 to vector<16x128xf32>
    %20 = arith.addf %19, %18 : vector<16x128xf32>
    %21 = arith.mulf %20, %13 : vector<16x128xf32>
    %22 = arith.addf %16, %21 : vector<16x128xf32>
    %c127_i32 = arith.constant 127 : i32
    %23 = tpu.dynamic_rotate %3 by %c127_i32 dim 1 : vector<16x128xf32>, i32 -> vector<16x128xf32>
    %24 = tpu.iota {dimensions = array<i32: 1>} : vector<16x128xi32>
    %c1_i32 = arith.constant 1 : i32
    %25 = vector.broadcast %c1_i32 : i32 to vector<16x128xi32>
    %26 = arith.addi %24, %25 : vector<16x128xi32>
    %c0_i32 = arith.constant 0 : i32
    %27 = vector.broadcast %c0_i32 : i32 to vector<16x128xi32>
    %28 = arith.cmpi sge, %26, %27 : vector<16x128xi32>
    %c1_i32_12 = arith.constant 1 : i32
    %29 = vector.broadcast %c1_i32_12 : i32 to vector<16x128xi32>
    %30 = arith.addi %24, %29 : vector<16x128xi32>
    %c128_i32 = arith.constant 128 : i32
    %31 = vector.broadcast %c128_i32 : i32 to vector<16x128xi32>
    %32 = arith.cmpi slt, %30, %31 : vector<16x128xi32>
    %33 = arith.andi %28, %32 : vector<16x128xi1>
    %cst_13 = arith.constant 0.000000e+00 : f32
    %34 = vector.broadcast %cst_13 : f32 to vector<16x128xf32>
    %35 = arith.select %33, %23, %34 : vector<16x128xi1>, vector<16x128xf32>
    %36 = arith.addf %3, %35 : vector<16x128xf32>
    %c1_i32_14 = arith.constant 1 : i32
    %37 = tpu.dynamic_rotate %3 by %c1_i32_14 dim 1 : vector<16x128xf32>, i32 -> vector<16x128xf32>
    %38 = tpu.iota {dimensions = array<i32: 1>} : vector<16x128xi32>
    %c-1_i32 = arith.constant -1 : i32
    %39 = vector.broadcast %c-1_i32 : i32 to vector<16x128xi32>
    %40 = arith.addi %38, %39 : vector<16x128xi32>
    %c0_i32_15 = arith.constant 0 : i32
    %41 = vector.broadcast %c0_i32_15 : i32 to vector<16x128xi32>
    %42 = arith.cmpi sge, %40, %41 : vector<16x128xi32>
    %c-1_i32_16 = arith.constant -1 : i32
    %43 = vector.broadcast %c-1_i32_16 : i32 to vector<16x128xi32>
    %44 = arith.addi %38, %43 : vector<16x128xi32>
    %c128_i32_17 = arith.constant 128 : i32
    %45 = vector.broadcast %c128_i32_17 : i32 to vector<16x128xi32>
    %46 = arith.cmpi slt, %44, %45 : vector<16x128xi32>
    %47 = arith.andi %42, %46 : vector<16x128xi1>
    %cst_18 = arith.constant 0.000000e+00 : f32
    %48 = vector.broadcast %cst_18 : f32 to vector<16x128xf32>
    %49 = arith.select %47, %37, %48 : vector<16x128xi1>, vector<16x128xf32>
    %50 = arith.addf %36, %49 : vector<16x128xf32>
    %c126_i32 = arith.constant 126 : i32
    %51 = tpu.dynamic_rotate %3 by %c126_i32 dim 1 : vector<16x128xf32>, i32 -> vector<16x128xf32>
    %52 = tpu.iota {dimensions = array<i32: 1>} : vector<16x128xi32>
    %c2_i32 = arith.constant 2 : i32
    %53 = vector.broadcast %c2_i32 : i32 to vector<16x128xi32>
    %54 = arith.addi %52, %53 : vector<16x128xi32>
    %c0_i32_19 = arith.constant 0 : i32
    %55 = vector.broadcast %c0_i32_19 : i32 to vector<16x128xi32>
    %56 = arith.cmpi sge, %54, %55 : vector<16x128xi32>
    %c2_i32_20 = arith.constant 2 : i32
    %57 = vector.broadcast %c2_i32_20 : i32 to vector<16x128xi32>
    %58 = arith.addi %52, %57 : vector<16x128xi32>
    %c128_i32_21 = arith.constant 128 : i32
    %59 = vector.broadcast %c128_i32_21 : i32 to vector<16x128xi32>
    %60 = arith.cmpi slt, %58, %59 : vector<16x128xi32>
    %61 = arith.andi %56, %60 : vector<16x128xi1>
    %cst_22 = arith.constant 0.000000e+00 : f32
    %62 = vector.broadcast %cst_22 : f32 to vector<16x128xf32>
    %63 = arith.select %61, %51, %62 : vector<16x128xi1>, vector<16x128xf32>
    %64 = arith.addf %50, %63 : vector<16x128xf32>
    %c2_i32_23 = arith.constant 2 : i32
    %65 = tpu.dynamic_rotate %3 by %c2_i32_23 dim 1 : vector<16x128xf32>, i32 -> vector<16x128xf32>
    %66 = tpu.iota {dimensions = array<i32: 1>} : vector<16x128xi32>
    %c-2_i32 = arith.constant -2 : i32
    %67 = vector.broadcast %c-2_i32 : i32 to vector<16x128xi32>
    %68 = arith.addi %66, %67 : vector<16x128xi32>
    %c0_i32_24 = arith.constant 0 : i32
    %69 = vector.broadcast %c0_i32_24 : i32 to vector<16x128xi32>
    %70 = arith.cmpi sge, %68, %69 : vector<16x128xi32>
    %c-2_i32_25 = arith.constant -2 : i32
    %71 = vector.broadcast %c-2_i32_25 : i32 to vector<16x128xi32>
    %72 = arith.addi %66, %71 : vector<16x128xi32>
    %c128_i32_26 = arith.constant 128 : i32
    %73 = vector.broadcast %c128_i32_26 : i32 to vector<16x128xi32>
    %74 = arith.cmpi slt, %72, %73 : vector<16x128xi32>
    %75 = arith.andi %70, %74 : vector<16x128xi1>
    %cst_27 = arith.constant 0.000000e+00 : f32
    %76 = vector.broadcast %cst_27 : f32 to vector<16x128xf32>
    %77 = arith.select %75, %65, %76 : vector<16x128xi1>, vector<16x128xf32>
    %78 = arith.addf %64, %77 : vector<16x128xf32>
    %c15_i32 = arith.constant 15 : i32
    %79 = tpu.dynamic_rotate %78 by %c15_i32 dim 0 : vector<16x128xf32>, i32 -> vector<16x128xf32>
    %80 = tpu.iota {dimensions = array<i32: 0>} : vector<16x128xi32>
    %c1_i32_28 = arith.constant 1 : i32
    %81 = vector.broadcast %c1_i32_28 : i32 to vector<16x128xi32>
    %82 = arith.addi %80, %81 : vector<16x128xi32>
    %c0_i32_29 = arith.constant 0 : i32
    %83 = vector.broadcast %c0_i32_29 : i32 to vector<16x128xi32>
    %84 = arith.cmpi sge, %82, %83 : vector<16x128xi32>
    %c1_i32_30 = arith.constant 1 : i32
    %85 = vector.broadcast %c1_i32_30 : i32 to vector<16x128xi32>
    %86 = arith.addi %80, %85 : vector<16x128xi32>
    %c16_i32 = arith.constant 16 : i32
    %87 = vector.broadcast %c16_i32 : i32 to vector<16x128xi32>
    %88 = arith.cmpi slt, %86, %87 : vector<16x128xi32>
    %89 = arith.andi %84, %88 : vector<16x128xi1>
    %cst_31 = arith.constant 0.000000e+00 : f32
    %90 = vector.broadcast %cst_31 : f32 to vector<16x128xf32>
    %91 = arith.select %89, %79, %90 : vector<16x128xi1>, vector<16x128xf32>
    %92 = arith.addf %78, %91 : vector<16x128xf32>
    %c1_i32_32 = arith.constant 1 : i32
    %93 = tpu.dynamic_rotate %78 by %c1_i32_32 dim 0 : vector<16x128xf32>, i32 -> vector<16x128xf32>
    %94 = tpu.iota {dimensions = array<i32: 0>} : vector<16x128xi32>
    %c-1_i32_33 = arith.constant -1 : i32
    %95 = vector.broadcast %c-1_i32_33 : i32 to vector<16x128xi32>
    %96 = arith.addi %94, %95 : vector<16x128xi32>
    %c0_i32_34 = arith.constant 0 : i32
    %97 = vector.broadcast %c0_i32_34 : i32 to vector<16x128xi32>
    %98 = arith.cmpi sge, %96, %97 : vector<16x128xi32>
    %c-1_i32_35 = arith.constant -1 : i32
    %99 = vector.broadcast %c-1_i32_35 : i32 to vector<16x128xi32>
    %100 = arith.addi %94, %99 : vector<16x128xi32>
    %c16_i32_36 = arith.constant 16 : i32
    %101 = vector.broadcast %c16_i32_36 : i32 to vector<16x128xi32>
    %102 = arith.cmpi slt, %100, %101 : vector<16x128xi32>
    %103 = arith.andi %98, %102 : vector<16x128xi1>
    %cst_37 = arith.constant 0.000000e+00 : f32
    %104 = vector.broadcast %cst_37 : f32 to vector<16x128xf32>
    %105 = arith.select %103, %93, %104 : vector<16x128xi1>, vector<16x128xf32>
    %106 = arith.addf %92, %105 : vector<16x128xf32>
    %c14_i32 = arith.constant 14 : i32
    %107 = tpu.dynamic_rotate %78 by %c14_i32 dim 0 : vector<16x128xf32>, i32 -> vector<16x128xf32>
    %108 = tpu.iota {dimensions = array<i32: 0>} : vector<16x128xi32>
    %c2_i32_38 = arith.constant 2 : i32
    %109 = vector.broadcast %c2_i32_38 : i32 to vector<16x128xi32>
    %110 = arith.addi %108, %109 : vector<16x128xi32>
    %c0_i32_39 = arith.constant 0 : i32
    %111 = vector.broadcast %c0_i32_39 : i32 to vector<16x128xi32>
    %112 = arith.cmpi sge, %110, %111 : vector<16x128xi32>
    %c2_i32_40 = arith.constant 2 : i32
    %113 = vector.broadcast %c2_i32_40 : i32 to vector<16x128xi32>
    %114 = arith.addi %108, %113 : vector<16x128xi32>
    %c16_i32_41 = arith.constant 16 : i32
    %115 = vector.broadcast %c16_i32_41 : i32 to vector<16x128xi32>
    %116 = arith.cmpi slt, %114, %115 : vector<16x128xi32>
    %117 = arith.andi %112, %116 : vector<16x128xi1>
    %cst_42 = arith.constant 0.000000e+00 : f32
    %118 = vector.broadcast %cst_42 : f32 to vector<16x128xf32>
    %119 = arith.select %117, %107, %118 : vector<16x128xi1>, vector<16x128xf32>
    %120 = arith.addf %106, %119 : vector<16x128xf32>
    %c2_i32_43 = arith.constant 2 : i32
    %121 = tpu.dynamic_rotate %78 by %c2_i32_43 dim 0 : vector<16x128xf32>, i32 -> vector<16x128xf32>
    %122 = tpu.iota {dimensions = array<i32: 0>} : vector<16x128xi32>
    %c-2_i32_44 = arith.constant -2 : i32
    %123 = vector.broadcast %c-2_i32_44 : i32 to vector<16x128xi32>
    %124 = arith.addi %122, %123 : vector<16x128xi32>
    %c0_i32_45 = arith.constant 0 : i32
    %125 = vector.broadcast %c0_i32_45 : i32 to vector<16x128xi32>
    %126 = arith.cmpi sge, %124, %125 : vector<16x128xi32>
    %c-2_i32_46 = arith.constant -2 : i32
    %127 = vector.broadcast %c-2_i32_46 : i32 to vector<16x128xi32>
    %128 = arith.addi %122, %127 : vector<16x128xi32>
    %c16_i32_47 = arith.constant 16 : i32
    %129 = vector.broadcast %c16_i32_47 : i32 to vector<16x128xi32>
    %130 = arith.cmpi slt, %128, %129 : vector<16x128xi32>
    %131 = arith.andi %126, %130 : vector<16x128xi1>
    %cst_48 = arith.constant 0.000000e+00 : f32
    %132 = vector.broadcast %cst_48 : f32 to vector<16x128xf32>
    %133 = arith.select %131, %121, %132 : vector<16x128xi1>, vector<16x128xf32>
    %134 = arith.addf %120, %133 : vector<16x128xf32>
    %cst_49 = arith.constant 8.000000e-02 : f32
    %135 = vector.broadcast %cst_49 : f32 to vector<16x128xf32>
    %136 = arith.mulf %135, %134 : vector<16x128xf32>
    %cst_50 = arith.constant 1.000000e+00 : f32
    %137 = vector.broadcast %cst_50 : f32 to vector<16x128xf32>
    %138 = arith.addf %137, %136 : vector<16x128xf32>
    %139 = arith.mulf %22, %138 : vector<16x128xf32>
    %cst_51 = arith.constant dense<0.000000e+00> : vector<128xf32>
    %140 = vector.multi_reduction <add>, %139, %cst_51 [0] : vector<16x128xf32> to vector<128xf32>
    %c0_52 = arith.constant 0 : index
    %c0_53 = arith.constant 0 : index
    %c0_54 = arith.constant 0 : index
    %141 = vector.load %arg3[%c0_52, %c0_53, %c0_54] : memref<1x1x128xf32, #tpu.memory_space<vmem>>, vector<1x1x128xf32>
    %142 = vector.shape_cast %141 : vector<1x1x128xf32> to vector<128xf32>
    %143 = vector.shape_cast %140 : vector<128xf32> to vector<1x1x128xf32>
    tpu.vector_store %arg3[%c0_52, %c0_53, %c0_54], %143 {strides = array<i32>} : memref<1x1x128xf32, #tpu.memory_space<vmem>>, vector<1x1x128xf32>,
    return
  }
  func.func @transform_0(%arg0: i32) -> (i32, i32, i32, i32) {
    %c0_i32 = arith.constant 0 : i32
    %c0_i32_0 = arith.constant 0 : i32
    %c0_i32_1 = arith.constant 0 : i32
    %c0_i32_2 = arith.constant 0 : i32
    return %arg0, %c0_i32, %c0_i32_0, %c0_i32_1 : i32, i32, i32, i32
  }
  func.func @transform_1(%arg0: i32) -> (i32, i32, i32, i32) {
    %c0_i32 = arith.constant 0 : i32
    %c0_i32_0 = arith.constant 0 : i32
    %c0_i32_1 = arith.constant 0 : i32
    %c0_i32_2 = arith.constant 0 : i32
    return %arg0, %c0_i32, %c0_i32_0, %c0_i32_1 : i32, i32, i32, i32
  }
  func.func @transform_2(%arg0: i32) -> (i32, i32, i32) {
    %c0_i32 = arith.constant 0 : i32
    %c0_i32_0 = arith.constant 0 : i32
    %c0_i32_1 = arith.constant 0 : i32
    return %arg0, %c0_i32, %c0_i32_0 : i32, i32, i32
  }
}

</mosaic_0001>

<llo_original>
// kernel: tpu_custom_call.1
$region0: #{tpu_custom_call.1}
  #allocation0 [shape = 'u32[]', space=smem, size = 0x4, offset = 0x4, fixed_abs, tag = 'smem constant byte address 0x4 - core index']
  #allocation1 [shape = 'u32[144,128]{1,0:T(1,128)}', space=vmem, size = 0x12000, scoped, tag = 'internal scratch']
  %s0 = inlined_call_operand.hbm [shape: f32[2,1,16,128], index: 0, kind: input, shape index: {}]
  %s1 = inlined_call_operand.hbm [shape: f32[2,1,16,128], index: 1, kind: input, shape index: {}]
  %s2 = inlined_call_operand.hbm [shape: f32[2,1,128], index: 2, kind: output, shape index: {}]
  %s3 = sld [smem:[#allocation0]]
  $region49: #{tpu_custom_call.1} parent=0
    _
  %s5 = ssub.s32 1, %s3
  %s6 = scalar_select 0, %s5, %s3
  $region1: #{tpu_custom_call.1} parent=0
    #allocation2 [shape = 'u8[16384]{0}', space=vmem, size = 0x4000, scoped, tag = 'input window, operand 0']
    #allocation3 [shape = 's32[2]{0}', space=sflag, size = 0x8, scoped, tag = 'scoped memory for tpu_custom_call.1']
    #allocation4 [shape = 's32[2]{0}', space=sflag, size = 0x8, scoped, tag = 'scoped memory for tpu_custom_call.1']
    #allocation5 [shape = 'u8[16384]{0}', space=vmem, size = 0x4000, scoped, tag = 'input window, operand 1']
    #allocation6 [shape = 's32[2]{0}', space=sflag, size = 0x8, scoped, tag = 'scoped memory for tpu_custom_call.1']
    #allocation7 [shape = 'u8[1024]{0}', space=vmem, size = 0x400, scoped, tag = 'output window, operand 0']
    %7 = vsyncpa [#allocation3], 0
    %s8 = scalar_lea.sflag [#allocation3], 1
    %9 = vsyncpa %s8, 0
    %10 = vsyncpa [#allocation6], 0
    %s11 = scalar_lea.sflag [#allocation6], 1
    %12 = vsyncpa %s11, 0
    %13 = vsyncpa [#allocation4], 0
    %s14 = scalar_lea.sflag [#allocation4], 1
    %15 = vsyncpa %s14, 0
    loop: start=0, step=1, limit=4
    $region2: #{tpu_custom_call.1} parent=1 // loop_pre_header
      _
    $region3: #{tpu_custom_call.1} parent=1 // loop_header
      %s17 = sphi 0, %s21
      %p18 = scmp.ge.s32.totalorder %s17, 4
      %s27 = sphi 0, %s29
      %s30 = sphi 0, %s27
      %s31 = sphi 0, %s30
      %s47 = sphi 0, %s31
      %s53 = sphi 0, %s55
      %s56 = sphi 0, %s53
      %s57 = sphi 0, %s56
      %s73 = sphi 0, %s57
      %s79 = sphi 0, %s81
      %s82 = sphi 0, %s79
      %s83 = sphi 0, %s82
      %s99 = sphi 0, %s83
    $region4: #{tpu_custom_call.1} parent=1 // loop_header_branch
      %20 = sbr.rel (%p18) target = $region8
    $region5: #{tpu_custom_call.1} parent=1 // loop_body
      %s22 = ssub.s32 %s17, 1
      %s23 = ssub.s32 %s17, 2
      %s24 = sadd.s32 %s17, 1
      %s25 = ssub.s32 %s17, %s24
      %p26 = scmp.eq.s32.totalorder %s25, 0
      %s28 = sadd.s32 %s27, 1
      %s29 = scalar_select %p26, %s27, %s28
      %p32 = pneg %p26
      %p33 = scmp.eq.s32.totalorder %s17, 1
      %p34 = por %p32, %p33
      %p35 = scmp.ne.s32.totalorder %s27, %s30
      %p36 = scmp.eq.s32.totalorder %s17, 0
      %p37 = por %p35, %p36
      %p38 = scmp.ne.s32.totalorder %s27, %s30
      %p39 = scmp.eq.s32.totalorder %s22, 1
      %p40 = por %p38, %p39
      %p41 = scmp.ne.s32.totalorder %s30, %s31
      %p42 = scmp.eq.s32.totalorder %s22, 0
      %p43 = por %p41, %p42
      %p44 = scmp.ne.s32.totalorder %s30, %s31
      %p45 = scmp.eq.s32.totalorder %s23, 1
      %p46 = por %p44, %p45
      %p48 = scmp.ne.s32.totalorder %s31, %s47
      %p49 = scmp.eq.s32.totalorder %s23, 0
      %p50 = por %p48, %p49
      %s51 = ssub.s32 %s17, %s24
      %p52 = scmp.eq.s32.totalorder %s51, 0
      %s54 = sadd.s32 %s53, 1
      %s55 = scalar_select %p52, %s53, %s54
      %p58 = pneg %p52
      %p59 = scmp.eq.s32.totalorder %s17, 1
      %p60 = por %p58, %p59
      %p61 = scmp.ne.s32.totalorder %s53, %s56
      %p62 = scmp.eq.s32.totalorder %s17, 0
      %p63 = por %p61, %p62
      %p64 = scmp.ne.s32.totalorder %s53, %s56
      %p65 = scmp.eq.s32.totalorder %s22, 1
      %p66 = por %p64, %p65
      %p67 = scmp.ne.s32.totalorder %s56, %s57
      %p68 = scmp.eq.s32.totalorder %s22, 0
      %p69 = por %p67, %p68
      %p70 = scmp.ne.s32.totalorder %s56, %s57
      %p71 = scmp.eq.s32.totalorder %s23, 1
      %p72 = por %p70, %p71
      %p74 = scmp.ne.s32.totalorder %s57, %s73
      %p75 = scmp.eq.s32.totalorder %s23, 0
      %p76 = por %p74, %p75
      %s77 = ssub.s32 %s17, %s24
      %p78 = scmp.eq.s32.totalorder %s77, 0
      %s80 = sadd.s32 %s79, 1
      %s81 = scalar_select %p78, %s79, %s80
      %p84 = pneg %p78
      %p85 = scmp.eq.s32.totalorder %s17, 1
      %p86 = por %p84, %p85
      %p87 = scmp.ne.s32.totalorder %s79, %s82
      %p88 = scmp.eq.s32.totalorder %s17, 0
      %p89 = por %p87, %p88
      %p90 = scmp.ne.s32.totalorder %s79, %s82
      %p91 = scmp.eq.s32.totalorder %s22, 1
      %p92 = por %p90, %p91
      %p93 = scmp.ne.s32.totalorder %s82, %s83
      %p94 = scmp.eq.s32.totalorder %s22, 0
      %p95 = por %p93, %p94
      %p96 = scmp.ne.s32.totalorder %s82, %s83
      %p97 = scmp.eq.s32.totalorder %s23, 1
      %p98 = por %p96, %p97
      %p100 = scmp.ne.s32.totalorder %s83, %s99
      %p101 = scmp.eq.s32.totalorder %s23, 0
      %p102 = por %p100, %p101
      %p103 = scmp.le.s32.totalorder 1, %s17
      %p104 = scmp.lt.s32.totalorder %s17, 3
      %p105 = pnand %p103, %p104
      %p106 = pneg %p105
      // Predicated region
      $region9: #{tpu_custom_call.1} parent=5 // pred_check
        _
      $region10: #{tpu_custom_call.1} parent=5 // pred_check_branch
        %108 = sbr.rel (%p105) target = $region12
      $region11: #{tpu_custom_call.1} parent=5 // pred_region
        %s109 = ssub.s32 %s17, 1
      $region12: #{tpu_custom_call.1} parent=5 // pred_fallthru
        _
      %p110 = scmp.lt.s32.totalorder %s17, 2
      // Predicated region
      $region13: #{tpu_custom_call.1} parent=5 // pred_check
        %p111 = pneg %p110
      $region14: #{tpu_custom_call.1} parent=5 // pred_check_branch
        %113 = sbr.rel (%p111) target = $region16
      $region15: #{tpu_custom_call.1} parent=5 // pred_region
        // Predicated region
        $region17: #{tpu_custom_call.1} parent=15 // pred_check
          %p114 = pneg %p37
        $region18: #{tpu_custom_call.1} parent=15 // pred_check_branch
          %116 = sbr.rel (%p114) target = $region20
        $region19: #{tpu_custom_call.1} parent=15 // pred_region
          %s117 = sand.u32 %s27, 1
          %s118 = scalar_lea.sflag [#allocation3], %s117
          %s119 = sand.u32 %s27, 1
          %s120 = smul.addr %s119, 16
          %s121 = scalar_lea.vmem [#allocation2], %s120
          %s123 = ssub.s32 256, 256
          %124 = vsyncadd %s118, %s123
          %s125 = smul.addr %s17, 2
          %s126 = smul.addr %s125, 128
          %s127 = scalar_lea.hbm %s0, %s126
          %s128 = sshll.u32 %s121, 4
          %s129 = int_to_ptr.vmem [resolvable:$true] %s128
          %134 = dma.hbm_to_vmem [thread:$0]  %s127, 256, %s129, %s118, 128, 128, 8
        $region20: #{tpu_custom_call.1} parent=15 // pred_fallthru
          _
        // Predicated region
        $region21: #{tpu_custom_call.1} parent=15 // pred_check
          %p135 = pneg %p63
        $region22: #{tpu_custom_call.1} parent=15 // pred_check_branch
          %137 = sbr.rel (%p135) target = $region24
        $region23: #{tpu_custom_call.1} parent=15 // pred_region
          %s138 = sand.u32 %s53, 1
          %s139 = scalar_lea.sflag [#allocation6], %s138
          %s140 = sand.u32 %s53, 1
          %s141 = smul.addr %s140, 16
          %s142 = scalar_lea.vmem [#allocation5], %s141
          %s144 = ssub.s32 256, 256
          %145 = vsyncadd %s139, %s144
          %s146 = smul.addr %s17, 2
          %s147 = smul.addr %s146, 128
          %s148 = scalar_lea.hbm %s1, %s147
          %s149 = sshll.u32 %s142, 4
          %s150 = int_to_ptr.vmem [resolvable:$true] %s149
          %155 = dma.hbm_to_vmem [thread:$0]  %s148, 256, %s150, %s139, 128, 128, 8
        $region24: #{tpu_custom_call.1} parent=15 // pred_fallthru
          _
      $region16: #{tpu_custom_call.1} parent=5 // pred_fallthru
        _
      %p156 = scmp.le.s32.totalorder 1, %s17
      %p157 = scmp.lt.s32.totalorder %s17, 3
      %p158 = pnand %p156, %p157
      %p159 = pneg %p158
      // Predicated region
      $region25: #{tpu_custom_call.1} parent=5 // pred_check
        _
      $region26: #{tpu_custom_call.1} parent=5 // pred_check_branch
        %161 = sbr.rel (%p158) target = $region28
      $region27: #{tpu_custom_call.1} parent=5 // pred_region
        %s162 = ssub.s32 %s17, 1
        %s163 = sand.u32 %s30, 1
        %s164 = scalar_lea.sflag [#allocation3], %s163
        %s165 = sand.u32 %s30, 1
        %s166 = smul.addr %s165, 16
        %s167 = scalar_lea.vmem [#allocation2], %s166
        // Predicated region
        $region29: #{tpu_custom_call.1} parent=27 // pred_check
          %p168 = pneg %p43
        $region30: #{tpu_custom_call.1} parent=27 // pred_check_branch
          %170 = sbr.rel (%p168) target = $region32
        $region31: #{tpu_custom_call.1} parent=27 // pred_region
          %171 = dma.done %s164, 256
        $region32: #{tpu_custom_call.1} parent=27 // pred_fallthru
          _
        %s172 = sand.u32 %s56, 1
        %s173 = scalar_lea.sflag [#allocation6], %s172
        %s174 = sand.u32 %s56, 1
        %s175 = smul.addr %s174, 16
        %s176 = scalar_lea.vmem [#allocation5], %s175
        // Predicated region
        $region33: #{tpu_custom_call.1} parent=27 // pred_check
          %p177 = pneg %p69
        $region34: #{tpu_custom_call.1} parent=27 // pred_check_branch
          %179 = sbr.rel (%p177) target = $region36
        $region35: #{tpu_custom_call.1} parent=27 // pred_region
          %180 = dma.done %s173, 256
        $region36: #{tpu_custom_call.1} parent=27 // pred_fallthru
          _
        %s181 = sand.u32 %s30, 1
        %s182 = scalar_lea.sflag [#allocation3], %s181
        %s183 = sand.u32 %s30, 1
        %s184 = smul.addr %s183, 16
        %s185 = scalar_lea.vmem [#allocation2], %s184
        %p186 = pneg %p43
        %p187 = pneg %p40
        %s188 = sand.u32 %s56, 1
        %s189 = scalar_lea.sflag [#allocation6], %s188
        %s190 = sand.u32 %s56, 1
        %s191 = smul.addr %s190, 16
        %s192 = scalar_lea.vmem [#allocation5], %s191
        %p193 = pneg %p69
        %p194 = pneg %p66
        %p195 = pneg %p95
        %p196 = pneg %p92
        %s197 = sand.u32 %s82, 1
        %s198 = scalar_lea.sflag [#allocation4], %s197
        %s199 = sand.u32 %s82, 1
        %s200 = scalar_lea.vmem [#allocation7], %s199
        %v201 = vld [vmem:[%s167] sm:$0xff]
        %v202 = vld [vmem:[%s167 + $0x8] sm:$0xff]
        %v203 = vld [vmem:[%s176] sm:$0xff]
        %v204 = vld [vmem:[%s176 + $0x8] sm:$0xff]
        %v205 = vsub.f32 0.0, %v201
        %v206 = vsub.f32 0.0, %v202
        %v207 = vmax.f32 %v205, 0.0
        %v208 = vmax.f32 %v206, 0.0
        %v209 = vand.u32 2147483647, %v201
        %v210 = vand.u32 2147483647, %v202
        %v211 = vsub.f32 0.0, %v209
        %v212 = vsub.f32 0.0, %v210
        %v213 = vmul.f32 %v211, 1.442695
        %v214 = vpow.pop %v213
        %v215 = vmul.f32 %v212, 1.442695
        %v216 = vpow.pop %v215
        %v217 = vadd.f32 %v214, 1.0
        %v218 = vlog2.pop %v217
        %v219 = vmul.f32 %v218, 0.6931472
        %v220 = vmul.f32 -0.5, %v214
        %v221 = vadd.f32 %v220, 1.0
        %v222 = vmul.f32 %v221, %v214
        %v223 = vand.u32 2147483647, %v214
        %vm224 = vcmp.lt.f32.partialorder %v223, 0.0004427343
        %v225 = vsel %vm224, %v222, %v219
        %v226 = vadd.f32 %v216, 1.0
        %v227 = vlog2.pop %v226
        %v228 = vmul.f32 %v227, 0.6931472
        %v229 = vmul.f32 -0.5, %v216
        %v230 = vadd.f32 %v229, 1.0
        %v231 = vmul.f32 %v230, %v216
        %v232 = vand.u32 2147483647, %v216
        %vm233 = vcmp.lt.f32.partialorder %v232, 0.0004427343
        %v234 = vsel %vm233, %v231, %v228
        %v235 = vadd.f32 %v207, %v225
        %v236 = vadd.f32 %v208, %v234
        %v237 = vsub.f32 1.0, %v203
        %v238 = vsub.f32 1.0, %v204
        %v239 = vmul.f32 %v237, %v201
        %v240 = vmul.f32 %v238, %v202
        %v241 = vadd.f32 %v203, 1.0
        %v242 = vadd.f32 %v204, 1.0
        %v243 = vmul.f32 %v241, %v235
        %v244 = vmul.f32 %v242, %v236
        %v245 = vadd.f32 %v239, %v243
        %v246 = vadd.f32 %v240, %v244
        %247 = vrot.lane.b32.xlu0 %v203, 127
        %v248 = vpop.permute.xlu0 %247
        %249 = vrot.lane.b32.xlu0 %v204, 127
        %v250 = vpop.permute.xlu0 %249
        %v251 = vlaneseq
        %v252 = vand.u32 %v251, 127
        %v253 = vadd.s32 %v252, 1
        %vm254 = vcmp.ge.s32.totalorder %v253, 0
        %vm255 = vcmp.lt.s32.totalorder %v253, 128
        %vm256 = vmand %vm254, %vm255
        %v257 = vsel %vm256, %v248, 0.0
        %v258 = vsel %vm256, %v250, 0.0
        %v259 = vadd.f32 %v203, %v257
        %v260 = vadd.f32 %v204, %v258
        %261 = vrot.lane.b32.xlu0 %v203, 1
        %v262 = vpop.permute.xlu0 %261
        %263 = vrot.lane.b32.xlu0 %v204, 1
        %v264 = vpop.permute.xlu0 %263
        %v265 = vadd.s32 %v252, 4294967295
        %vm266 = vcmp.ge.s32.totalorder %v265, 0
        %vm267 = vcmp.lt.s32.totalorder %v265, 128
        %vm268 = vmand %vm266, %vm267
        %v269 = vsel %vm268, %v262, 0.0
        %v270 = vsel %vm268, %v264, 0.0
        %v271 = vadd.f32 %v259, %v269
        %v272 = vadd.f32 %v260, %v270
        %273 = vrot.lane.b32.xlu0 %v203, 126
        %v274 = vpop.permute.xlu0 %273
        %275 = vrot.lane.b32.xlu0 %v204, 126
        %v276 = vpop.permute.xlu0 %275
        %v277 = vadd.s32 %v252, 2
        %vm278 = vcmp.ge.s32.totalorder %v277, 0
        %vm279 = vcmp.lt.s32.totalorder %v277, 128
        %vm280 = vmand %vm278, %vm279
        %v281 = vsel %vm280, %v274, 0.0
        %v282 = vsel %vm280, %v276, 0.0
        %v283 = vadd.f32 %v271, %v281
        %v284 = vadd.f32 %v272, %v282
        %285 = vrot.lane.b32.xlu0 %v203, 2
        %v286 = vpop.permute.xlu0 %285
        %287 = vrot.lane.b32.xlu0 %v204, 2
        %v288 = vpop.permute.xlu0 %287
        %v289 = vadd.s32 %v252, 4294967294
        %vm290 = vcmp.ge.s32.totalorder %v289, 0
        %vm291 = vcmp.lt.s32.totalorder %v289, 128
        %vm292 = vmand %vm290, %vm291
        %v293 = vsel %vm292, %v286, 0.0
        %v294 = vsel %vm292, %v288, 0.0
        %v295 = vadd.f32 %v283, %v293
        %v296 = vadd.f32 %v284, %v294
        %v297 = vrot.slane %v295, 1
        %v298 = vrot.slane %v296, 1
        %v299 = vlaneseq
        %v300 = vshrl.u32 %v299, 7
        %vm301 = vcmp.lt.s32.totalorder %v300, 7
        %v302 = vsel %vm301, %v297, %v298
        %v303 = vsel %vm301, %v298, %v297
        %v304 = vadd.s32 %v300, 8
        %v305 = vadd.s32 %v300, 1
        %v306 = vadd.s32 %v304, 1
        %vm307 = vcmp.ge.s32.totalorder %v305, 0
        %vm308 = vcmp.ge.s32.totalorder %v306, 0
        %vm309 = vcmp.lt.s32.totalorder %v305, 16
        %vm310 = vcmp.lt.s32.totalorder %v306, 16
        %vm311 = vmand %vm307, %vm309
        %vm312 = vmand %vm308, %vm310
        %v313 = vsel %vm311, %v302, 0.0
        %v314 = vsel %vm312, %v303, 0.0
        %v315 = vadd.f32 %v295, %v313
        %v316 = vadd.f32 %v296, %v314
        %v317 = vrot.slane %v295, 7
        %v318 = vrot.slane %v296, 7
        %vm319 = vcmp.lt.s32.totalorder %v300, 1
        %v320 = vsel %vm319, %v317, %v318
        %v321 = vsel %vm319, %v318, %v317
        %v322 = vadd.s32 %v300, 4294967295
        %v323 = vadd.s32 %v304, 4294967295
        %vm324 = vcmp.ge.s32.totalorder %v322, 0
        %vm325 = vcmp.ge.s32.totalorder %v323, 0
        %vm326 = vcmp.lt.s32.totalorder %v322, 16
        %vm327 = vcmp.lt.s32.totalorder %v323, 16
        %vm328 = vmand %vm324, %vm326
        %vm329 = vmand %vm325, %vm327
        %v330 = vsel %vm328, %v321, 0.0
        %v331 = vsel %vm329, %v320, 0.0
        %v332 = vadd.f32 %v315, %v330
        %v333 = vadd.f32 %v316, %v331
        %v334 = vrot.slane %v295, 2
        %v335 = vrot.slane %v296, 2
        %vm336 = vcmp.lt.s32.totalorder %v300, 6
        %v337 = vsel %vm336, %v334, %v335
        %v338 = vsel %vm336, %v335, %v334
        %v339 = vadd.s32 %v300, 2
        %v340 = vadd.s32 %v304, 2
        %vm341 = vcmp.ge.s32.totalorder %v339, 0
        %vm342 = vcmp.ge.s32.totalorder %v340, 0
        %vm343 = vcmp.lt.s32.totalorder %v339, 16
        %vm344 = vcmp.lt.s32.totalorder %v340, 16
        %vm345 = vmand %vm341, %vm343
        %vm346 = vmand %vm342, %vm344
        %v347 = vsel %vm345, %v337, 0.0
        %v348 = vsel %vm346, %v338, 0.0
        %v349 = vadd.f32 %v332, %v347
        %v350 = vadd.f32 %v333, %v348
        %v351 = vrot.slane %v295, 6
        %v352 = vrot.slane %v296, 6
        %vm353 = vcmp.lt.s32.totalorder %v300, 2
        %v354 = vsel %vm353, %v351, %v352
        %v355 = vsel %vm353, %v352, %v351
        %v356 = vadd.s32 %v300, 4294967294
        %v357 = vadd.s32 %v304, 4294967294
        %vm358 = vcmp.ge.s32.totalorder %v356, 0
        %vm359 = vcmp.ge.s32.totalorder %v357, 0
        %vm360 = vcmp.lt.s32.totalorder %v356, 16
        %vm361 = vcmp.lt.s32.totalorder %v357, 16
        %vm362 = vmand %vm358, %vm360
        %vm363 = vmand %vm359, %vm361
        %v364 = vsel %vm362, %v355, 0.0
        %v365 = vsel %vm363, %v354, 0.0
        %v366 = vadd.f32 %v349, %v364
        %v367 = vadd.f32 %v350, %v365
        %v368 = vmul.f32 %v366, 0.08
        %v369 = vmul.f32 %v367, 0.08
        %v370 = vadd.f32 %v368, 1.0
        %v371 = vadd.f32 %v369, 1.0
        %v372 = vmul.f32 %v245, %v370
        %v373 = vmul.f32 %v246, %v371
        %v374 = vadd.f32 %v372, %v373
        %v375 = vrot.slane %v374, 4
        %v376 = vadd.f32 %v374, %v375
        %v377 = vrot.slane %v376, 2
        %v378 = vadd.f32 %v376, %v377
        %v379 = vrot.slane %v378, 1
        %v380 = vadd.f32 %v378, %v379
        %381 = vst [vmem:[%s200] sm:$0x1] %v380
        %s382 = sand.u32 %s82, 1
        %s383 = scalar_lea.sflag [#allocation4], %s382
        %s384 = sand.u32 %s82, 1
        %s385 = scalar_lea.vmem [#allocation7], %s384
        // Predicated region
        $region37: #{tpu_custom_call.1} parent=27 // pred_check
          %p386 = pneg %p92
        $region38: #{tpu_custom_call.1} parent=27 // pred_check_branch
          %388 = sbr.rel (%p386) target = $region40
        $region39: #{tpu_custom_call.1} parent=27 // pred_region
          %s390 = ssub.s32 16, 16
          %391 = vsyncadd %s383, %s390
          %s392 = smul.addr %s22, 16
          %s393 = scalar_lea.hbm %s2, %s392
          %s395 = sshll.u32 %s385, 4
          %s396 = int_to_ptr.vmem [resolvable:$true] %s395
          %398 = dma.vmem_to_hbm [thread:$0]  %s396, 16, %s393, %s383
        $region40: #{tpu_custom_call.1} parent=27 // pred_fallthru
          _
      $region28: #{tpu_custom_call.1} parent=5 // pred_fallthru
        _
      %p399 = scmp.le.s32.totalorder 2, %s17
      // Predicated region
      $region41: #{tpu_custom_call.1} parent=5 // pred_check
        %p400 = pneg %p399
      $region42: #{tpu_custom_call.1} parent=5 // pred_check_branch
        %402 = sbr.rel (%p400) target = $region44
      $region43: #{tpu_custom_call.1} parent=5 // pred_region
        %s403 = ssub.s32 %s17, 2
        // Predicated region
        $region45: #{tpu_custom_call.1} parent=43 // pred_check
          %p404 = pneg %p98
        $region46: #{tpu_custom_call.1} parent=43 // pred_check_branch
          %406 = sbr.rel (%p404) target = $region48
        $region47: #{tpu_custom_call.1} parent=43 // pred_region
          %s407 = sand.u32 %s83, 1
          %s408 = scalar_lea.sflag [#allocation4], %s407
          %s409 = sand.u32 %s83, 1
          %s410 = scalar_lea.vmem [#allocation7], %s409
          %411 = dma.done %s408, 16
        $region48: #{tpu_custom_call.1} parent=43 // pred_fallthru
          _
      $region44: #{tpu_custom_call.1} parent=5 // pred_fallthru
        _
    $region6: #{tpu_custom_call.1} parent=1 // loop_footer
      %s21 = sadd.s32 1, %s17
    $region7: #{tpu_custom_call.1} parent=1 // loop_footer_branch
      %16 = sbr.rel target = $region3
    $region8: #{tpu_custom_call.1} parent=1 // loop_exit
      _
    %412 = vsyncpa [#allocation3], 1
    %s413 = scalar_lea.sflag [#allocation3], 1
    %414 = vsyncpa %s413, 1
    %415 = vsyncpa [#allocation6], 1
    %s416 = scalar_lea.sflag [#allocation6], 1
    %417 = vsyncpa %s416, 1
    %418 = vsyncpa [#allocation4], 1
    %s419 = scalar_lea.sflag [#allocation4], 1
    %420 = vsyncpa %s419, 1

</llo_original>
